<compile_context>
chip_gen: v5e
topology: v5e:2x2
jax: 0.10.0
libtpu: 0.0.40
codegen_flags: <defaults>
</compile_context>

<pallas_src>
import jax
import jax.numpy as jnp
from jax.experimental import pallas as pl
from jax.experimental.pallas import tpu as pltpu


def _gated_mul_kernel(z_ref, x_ref, o_ref):
    # z_ref: (row_tile, 1) per-row gate (same dtype as x); broadcasts over the
    # 128-wide lane axis for free.  x_ref/o_ref: (row_tile, lane_tile).
    o_ref[...] = x_ref[...] * z_ref[...]


def _compute_gate(alpha, scale, u, *, training, beta, gamma, zeta, use_scale):
    """Tiny (C,)-sized gate computation, hoisted out of the grid loop."""
    alpha = alpha.astype(jnp.float32)
    if training:
        u = u.astype(jnp.float32)
        # robustness: keep u away from {0, 1} so log() stays finite
        u = jnp.clip(u, 1e-7, 1.0 - 1e-7)
        s = jax.nn.sigmoid((jnp.log(u) - jnp.log(1.0 - u) + alpha) / beta)
    else:
        s = jax.nn.sigmoid(alpha)
    z = jnp.clip(s * (zeta - gamma) + gamma, 0.0, 1.0)
    if use_scale:
        z = scale.astype(jnp.float32) * z
    return z  # (C,) float32


def _choose_blocks(R, L, itemsize, block_budget_bytes):
    """Pick (row_tile, lane_tile): big, VMEM-budgeted, (8,128)-legal."""
    # Lane tile: full extent if it fits, else a large multiple of 128.
    lane_cap = max(128, min(8192, block_budget_bytes // (8 * itemsize)))
    if L <= lane_cap:
        lane_tile = L                       # full extent (always legal)
    else:
        lane_tile = (lane_cap // 128) * 128
    # Row tile: fill the remaining budget; multiple of 8 unless full extent.
    max_rows = max(8, block_budget_bytes // max(1, lane_tile * itemsize))
    if R <= max_rows:
        row_tile = R                        # full extent (always legal)
    else:
        row_tile = (max_rows // 8) * 8
    return row_tile, lane_tile


def concrete_dropout_forward(x, alpha, scale, *, u=None, active=True,
                             training=True, beta=2.0 / 3.0, gamma=-0.1,
                             zeta=1.1, use_scale=True,
                             block_budget_bytes=2 << 20):
    """x: (N, C, *spatial); alpha/scale/u: (C,). Returns array shaped like x."""
    if not active:
        return x

    shape = x.shape
    N, C = shape[0], shape[1]
    L = 1
    for d in shape[2:]:
        L *= d
    R = N * C

    # Zero-data-movement view: rows = (n, c) pairs, lanes = flattened spatial.
    x2 = x.reshape(R, L)

    if training and u is None:
        raise ValueError("training mode requires uniform noise u of shape (C,)")

    # Per-channel gate, computed once (tiny), broadcast to one value per row.
    z = _compute_gate(alpha, scale, u, training=training, beta=beta,
                      gamma=gamma, zeta=zeta, use_scale=use_scale)
    z_rows = jnp.broadcast_to(z[None, :], (N, C)).reshape(R, 1).astype(x.dtype)

    itemsize = jnp.dtype(x.dtype).itemsize
    row_tile, lane_tile = _choose_blocks(R, L, itemsize, block_budget_bytes)
    grid = (pl.cdiv(R, row_tile), pl.cdiv(L, lane_tile))

    z_spec = pl.BlockSpec((row_tile, 1), lambda i, j: (i, 0))
    x_spec = pl.BlockSpec((row_tile, lane_tile), lambda i, j: (i, j))

    out2 = pl.pallas_call(
        _gated_mul_kernel,
        out_shape=jax.ShapeDtypeStruct((R, L), x.dtype),
        grid_spec=pltpu.PrefetchScalarGridSpec(
            num_scalar_prefetch=0,
            grid=grid,
            in_specs=[z_spec, x_spec],
            out_specs=x_spec,
        ),
        compiler_params=pltpu.CompilerParams(
            dimension_semantics=("parallel", "parallel")),
    )(z_rows, x2)

    return out2.reshape(shape)


def _reference_forward(x, alpha, scale, u, *, training, beta, gamma, zeta,
                       use_scale):
    """Pure-JAX reference of the PyTorch forward (active=True)."""
    if training:
        s = jax.nn.sigmoid((jnp.log(u) - jnp.log(1.0 - u) + alpha) / beta)
        s = s * (zeta - gamma) + gamma
        z = jnp.clip(s, 0.0, 1.0)
    else:
        z = jnp.clip(jax.nn.sigmoid(alpha) * (zeta - gamma) + gamma, 0.0, 1.0)
    if use_scale:
        z = scale * z
    return x * z[None, :, None, None]


if __name__ == "__main__":
    # Module params: size == number of channels C (per-channel gate).
    N, C, H, W = 2, 4, 16, 16
    beta, gamma, zeta = 2.0 / 3.0, -0.1, 1.1

    key = jax.random.PRNGKey(0)
    kx, ka, ku = jax.random.split(key, 3)

    x = jax.random.normal(kx, (N, C, H, W), dtype=jnp.float32)
    # alpha ~ Normal(mean=0, std=0.01)  (matching __init__)
    alpha = 0.0 + 0.01 * jax.random.normal(ka, (C,), dtype=jnp.float32)
    scale = jnp.ones((C,), dtype=jnp.float32)          # self.scale = ones(size)
    # concrete-dropout noise u ~ Uniform(0, 1) of shape (C,)
    u = jax.random.uniform(ku, (C,), dtype=jnp.float32,
                           minval=1e-6, maxval=1.0 - 1e-6)

    # training / active forward through the Pallas kernel
    out = concrete_dropout_forward(x, alpha, scale, u=u, active=True,
                                   training=True, beta=beta, gamma=gamma,
                                   zeta=zeta, use_scale=True)
    out = jax.block_until_ready(out)
    ref = _reference_forward(x, alpha, scale, u, training=True, beta=beta,
                             gamma=gamma, zeta=zeta, use_scale=True)
    assert out.shape == x.shape and out.dtype == x.dtype
    assert jnp.allclose(out, ref, atol=1e-5, rtol=1e-5)

    # eval-mode path (no noise)
    out_eval = concrete_dropout_forward(x, alpha, scale, active=True,
                                        training=False, beta=beta, gamma=gamma,
                                        zeta=zeta, use_scale=True)
    out_eval = jax.block_until_ready(out_eval)
    ref_eval = _reference_forward(x, alpha, scale, u, training=False,
                                  beta=beta, gamma=gamma, zeta=zeta,
                                  use_scale=True)
    assert jnp.allclose(out_eval, ref_eval, atol=1e-5, rtol=1e-5)

    # inactive module is the identity (handled in the wrapper, like PyTorch)
    out_inactive = concrete_dropout_forward(x, alpha, scale, active=False)
    assert jnp.array_equal(out_inactive, x)

    print("KERNEL_OK")
</pallas_src>

<mosaic_0001>
module attributes {stable_mosaic.version = 11 : i64} {
  func.func @_gated_mul_kernel(%arg0: i32, %arg1: i32, %arg2: memref<8x1xf32, #tpu.memory_space<vmem>>, %arg3: memref<8x256xf32, #tpu.memory_space<vmem>>, %arg4: memref<8x256xf32, #tpu.memory_space<vmem>>) attributes {dimension_semantics = [#tpu.dimension_semantics<parallel>, #tpu.dimension_semantics<parallel>], iteration_bounds = array<i64: 1, 1>, scalar_prefetch = 0 : i64, scratch_operands = 0 : i64, tpu.core_type = #tpu.core_type<tc>, window_params = [{transform_indices = @transform_0, window_bounds = array<i64: 8, 1>}, {transform_indices = @transform_1, window_bounds = array<i64: 8, 256>}, {transform_indices = @transform_2, window_bounds = array<i64: 8, 256>}]} {
    %c0 = arith.constant 0 : index
    %c0_0 = arith.constant 0 : index
    %0 = vector.load %arg3[%c0, %c0_0] : memref<8x256xf32, #tpu.memory_space<vmem>>, vector<8x256xf32>
    %c0_1 = arith.constant 0 : index
    %c0_2 = arith.constant 0 : index
    %1 = vector.load %arg2[%c0_1, %c0_2] : memref<8x1xf32, #tpu.memory_space<vmem>>, vector<8x1xf32>
    %2 = vector.broadcast %1 : vector<8x1xf32> to vector<8x256xf32>
    %3 = arith.mulf %0, %2 : vector<8x256xf32>
    %c0_3 = arith.constant 0 : index
    %c0_4 = arith.constant 0 : index
    %4 = vector.load %arg4[%c0_3, %c0_4] : memref<8x256xf32, #tpu.memory_space<vmem>>, vector<8x256xf32>
    tpu.vector_store %arg4[%c0_3, %c0_4], %3 {strides = array<i32>} : memref<8x256xf32, #tpu.memory_space<vmem>>, vector<8x256xf32>,
    return
  }
  func.func @transform_0(%arg0: i32, %arg1: i32) -> (i32, i32) {
    %c0_i32 = arith.constant 0 : i32
    %c0_i32_0 = arith.constant 0 : i32
    return %arg0, %c0_i32 : i32, i32
  }
  func.func @transform_1(%arg0: i32, %arg1: i32) -> (i32, i32) {
    %c0_i32 = arith.constant 0 : i32
    return %arg0, %arg1 : i32, i32
  }
  func.func @transform_2(%arg0: i32, %arg1: i32) -> (i32, i32) {
    %c0_i32 = arith.constant 0 : i32
    return %arg0, %arg1 : i32, i32
  }
}

</mosaic_0001>

<llo_original>
// kernel: tpu_custom_call.1
$region0: #{tpu_custom_call.1}
  #allocation0 [shape = 'u32[]', space=smem, size = 0x4, offset = 0x4, fixed_abs, tag = 'smem constant byte address 0x4 - core index']
  #allocation1 [shape = 'u32[72,128]{1,0:T(1,128)}', space=vmem, size = 0x9000, scoped, tag = 'internal scratch']
  %s0 = inlined_call_operand.vmem [shape: f32[8,1], index: 0, kind: input, shape index: {}]
  %s1 = inlined_call_operand.hbm [shape: f32[8,256], index: 1, kind: input, shape index: {}]
  %s2 = inlined_call_operand.hbm [shape: f32[8,256], index: 2, kind: output, shape index: {}]
  %s3 = sld [smem:[#allocation0]]
  $region22: #{tpu_custom_call.1} parent=0
    _
  %s5 = ssub.s32 1, %s3
  %s6 = scalar_select 0, %s5, %s3
  $region1: #{tpu_custom_call.1} parent=0
    #allocation2 [shape = 'u8[8192]{0}', space=vmem, size = 0x2000, scoped, tag = 'input window, operand 1, single buffered']
    #allocation3 [shape = 's32[1]{0}', space=sflag, size = 0x4, scoped, tag = 'scoped memory for tpu_custom_call.1']
    #allocation4 [shape = 's32[1]{0}', space=sflag, size = 0x4, scoped, tag = 'scoped memory for tpu_custom_call.1']
    #allocation5 [shape = 'u8[8192]{0}', space=vmem, size = 0x2000, scoped, tag = 'output window, operand 0, single buffered']
    %7 = vsyncpa [#allocation3], 0
    %8 = vsyncpa [#allocation4], 0
    // Predicated region
    $region2: #{tpu_custom_call.1} parent=1 // pred_check
      _
    $region3: #{tpu_custom_call.1} parent=1 // pred_check_branch
      %10 = sbr.rel (0) target = $region5
    $region4: #{tpu_custom_call.1} parent=1 // pred_region
      _
    $region5: #{tpu_custom_call.1} parent=1 // pred_fallthru
      _
    // Predicated region
    $region6: #{tpu_custom_call.1} parent=1 // pred_check
      _
    $region7: #{tpu_custom_call.1} parent=1 // pred_check_branch
      %12 = sbr.rel (0) target = $region9
    $region8: #{tpu_custom_call.1} parent=1 // pred_region
      %14 = vsyncadd [#allocation3], 0
      %s16 = sshll.u32 %s1, 4
      %s17 = int_to_ptr.hbm [resolvable:$true] %s16
      %s18 = sshll.u32 [#allocation2], 4
      %s19 = int_to_ptr.vmem [resolvable:$true] %s18
      %21 = dma.hbm_to_vmem [thread:$0]  %s17, 256, %s19, [#allocation3]
    $region9: #{tpu_custom_call.1} parent=1 // pred_fallthru
      _
    // Predicated region
    $region10: #{tpu_custom_call.1} parent=1 // pred_check
      _
    $region11: #{tpu_custom_call.1} parent=1 // pred_check_branch
      %23 = sbr.rel (0) target = $region13
    $region12: #{tpu_custom_call.1} parent=1 // pred_region
      %25 = dma.done [#allocation3], 256
    $region13: #{tpu_custom_call.1} parent=1 // pred_fallthru
      _
    %v26 = vld [vmem:[#allocation2] sm:$0xff]
    %v27 = vld [vmem:[#allocation2 + $0x8] sm:$0xff]
    %v28 = vld [vmem:[%s0] sm:$0xff]
    %30 = vset.pattern.permute.xlu0 0
    %31 = vperm.xlu0 %30, %v28
    %v32 = vpop.permute.xlu0 %31
    %v34 = vmul.f32 %v26, %v32
    %v35 = vmul.f32 %v27, %v32
    %36 = vst [vmem:[#allocation5] sm:$0xff] %v34
    %37 = vst [vmem:[#allocation5 + $0x8] sm:$0xff] %v35
    // Predicated region
    $region14: #{tpu_custom_call.1} parent=1 // pred_check
      _
    $region15: #{tpu_custom_call.1} parent=1 // pred_check_branch
      %39 = sbr.rel (0) target = $region17
    $region16: #{tpu_custom_call.1} parent=1 // pred_region
      %41 = vsyncadd [#allocation4], 0
      %s43 = sshll.u32 [#allocation5], 4
      %s44 = int_to_ptr.vmem [resolvable:$true] %s43
      %s45 = sshll.u32 %s2, 4
      %s46 = int_to_ptr.hbm [resolvable:$true] %s45
      %48 = dma.vmem_to_hbm [thread:$0]  %s44, 256, %s46, [#allocation4]
    $region17: #{tpu_custom_call.1} parent=1 // pred_fallthru
      _
    // Predicated region
    $region18: #{tpu_custom_call.1} parent=1 // pred_check
      _
    $region19: #{tpu_custom_call.1} parent=1 // pred_check_branch
      %50 = sbr.rel (0) target = $region21
    $region20: #{tpu_custom_call.1} parent=1 // pred_region
      %52 = dma.done [#allocation4], 256
    $region21: #{tpu_custom_call.1} parent=1 // pred_fallthru
      _
    %53 = vsyncpa [#allocation3], 1
    %54 = vsyncpa [#allocation4], 1

</llo_original>
